<compile_context>
chip_gen: v5e
topology: v5e:2x2
jax: 0.10.0
libtpu: 0.0.40
codegen_flags: <defaults>
</compile_context>

<pallas_src>
from functools import partial

import jax
import jax.numpy as jnp
from jax import lax
from jax.experimental import pallas as pl
from jax.experimental.pallas import tpu as pltpu

LANE = 128


def _cumsum_kernel(x_ref, o_ref, carry_ref, *, c_blk, unroll):
    # x_ref / o_ref: (C_BLK, SUB_TILE, 128) f32 (N dim squeezed away)
    # carry_ref:     (SUB_TILE, 128) f32 running sum over previous C blocks
    @pl.when(pl.program_id(2) == 0)
    def _():
        carry_ref[...] = jnp.zeros_like(carry_ref)

    def body(c, acc):
        acc = acc + x_ref[c]                    # per-channel load (bounded live set)
        o_ref[c] = acc.astype(o_ref.dtype)      # direct store, no concatenate
        return acc

    carry_ref[...] = lax.fori_loop(0, c_blk, body, carry_ref[...], unroll=unroll)


def cumsum_dim1(x: jax.Array) -> jax.Array:
    """cumsum along axis=1 of an NCHW float32 tensor via a Pallas TPU kernel."""
    N, C, H, W = x.shape
    HW = H * W

    R = -(-HW // LANE)                          # sublane rows per (n, c) slab

    # ---- channel block: prefer a divisor of C so no padding is needed -------
    if C <= 32:
        c_blk = C
    else:
        c_blk = next(d for d in range(32, 0, -1) if C % d == 0)
        if c_blk < 8:                           # awkward C: pad rather than tiny blocks
            c_blk = 32
    C_pad = -(-C // c_blk) * c_blk

    # ---- sublane tile: keep each block ~0.5-2 MiB to amortize step overhead -
    sub_cap = max(8, min(256, (4096 // c_blk) // 8 * 8))
    if R <= sub_cap:
        sub_tile = R                            # full extent -> no (8,128) issue, no pad
    else:
        sub_tile = next((t for t in range(sub_cap, 7, -8) if R % t == 0), sub_cap)
    R_pad = -(-R // sub_tile) * sub_tile

    # v7x has 2 TensorCores: keep the parallel grid extent >= 2 when cheap.
    if N * (R_pad // sub_tile) < 2 and sub_tile % 16 == 0:
        sub_tile //= 2

    HW_pad = R_pad * LANE

    x3 = x.reshape(N, C, HW)
    padded = (C_pad != C) or (HW_pad != HW)
    if padded:
        x3 = jnp.pad(x3, ((0, 0), (0, C_pad - C), (0, HW_pad - HW)))
    x4 = x3.reshape(N, C_pad, R_pad, LANE)

    grid = (N, R_pad // sub_tile, C_pad // c_blk)

    kernel = partial(_cumsum_kernel, c_blk=c_blk, unroll=min(8, c_blk))

    out = pl.pallas_call(
        kernel,
        out_shape=jax.ShapeDtypeStruct((N, C_pad, R_pad, LANE), x.dtype),
        grid_spec=pltpu.PrefetchScalarGridSpec(
            num_scalar_prefetch=0,
            grid=grid,
            in_specs=[
                pl.BlockSpec((None, c_blk, sub_tile, LANE),
                             lambda n, r, c: (n, c, r, 0)),
            ],
            out_specs=pl.BlockSpec((None, c_blk, sub_tile, LANE),
                                   lambda n, r, c: (n, c, r, 0)),
            scratch_shapes=[pltpu.VMEM((sub_tile, LANE), jnp.float32)],
        ),
        compiler_params=pltpu.CompilerParams(
            dimension_semantics=("parallel", "parallel", "arbitrary"),
        ),
    )(x4)

    if padded:
        out = out.reshape(N, C_pad, HW_pad)[:, :C, :HW]
    return out.reshape(N, C, H, W)


if __name__ == "__main__":
    key = jax.random.PRNGKey(0)
    x = jax.random.normal(key, (2, 4, 16, 16), dtype=jnp.float32)

    y = cumsum_dim1(x)
    jax.block_until_ready(y)

    # correctness check against reference
    y_ref = jnp.cumsum(x, axis=1)
    assert y.shape == (2, 4, 16, 16)
    assert y.dtype == jnp.float32
    assert jnp.allclose(y, y_ref, atol=1e-5, rtol=1e-5)

    print("KERNEL_OK")
</pallas_src>

<mosaic_0001>
module attributes {stable_mosaic.version = 11 : i64} {
  func.func @_cumsum_kernel(%arg0: i32, %arg1: i32, %arg2: i32, %arg3: memref<1x4x2x128xf32, #tpu.memory_space<vmem>>, %arg4: memref<1x4x2x128xf32, #tpu.memory_space<vmem>>, %arg5: memref<2x128xf32, #tpu.memory_space<vmem>>) attributes {dimension_semantics = [#tpu.dimension_semantics<parallel>, #tpu.dimension_semantics<parallel>, #tpu.dimension_semantics<arbitrary>], iteration_bounds = array<i64: 2, 1, 1>, scalar_prefetch = 0 : i64, scratch_operands = 1 : i64, tpu.core_type = #tpu.core_type<tc>, window_params = [{transform_indices = @transform_0, window_bounds = array<i64: 1, 4, 2, 128>}, {transform_indices = @transform_1, window_bounds = array<i64: 1, 4, 2, 128>}]} {
    %c0_i32 = arith.constant 0 : i32
    %0 = arith.cmpi eq, %arg2, %c0_i32 : i32
    %1 = arith.extui %0 : i1 to i32
    %c0_i32_0 = arith.constant 0 : i32
    %2 = arith.cmpi ne, %1, %c0_i32_0 : i32
    scf.if %2 {
      %cst = arith.constant 0.000000e+00 : f32
      %37 = vector.broadcast %cst : f32 to vector<2x128xf32>
      %c0_29 = arith.constant 0 : index
      %c0_30 = arith.constant 0 : index
      %38 = vector.load %arg5[%c0_29, %c0_30] : memref<2x128xf32, #tpu.memory_space<vmem>>, vector<2x128xf32>
      tpu.vector_store %arg5[%c0_29, %c0_30], %37 {strides = array<i32>} : memref<2x128xf32, #tpu.memory_space<vmem>>, vector<2x128xf32>,
    } else {
    }
    %c0 = arith.constant 0 : index
    %c0_1 = arith.constant 0 : index
    %3 = vector.load %arg5[%c0, %c0_1] : memref<2x128xf32, #tpu.memory_space<vmem>>, vector<2x128xf32>
    %c0_i32_2 = arith.constant 0 : i32
    %c0_3 = arith.constant 0 : index
    %4 = arith.index_cast %c0_i32_2 : i32 to index
    %c0_4 = arith.constant 0 : index
    %c0_5 = arith.constant 0 : index
    %5 = vector.load %arg3[%c0_3, %4, %c0_4, %c0_5] : memref<1x4x2x128xf32, #tpu.memory_space<vmem>>, vector<1x1x2x128xf32>
    %6 = vector.shape_cast %5 : vector<1x1x2x128xf32> to vector<2x128xf32>
    %7 = arith.addf %3, %6 : vector<2x128xf32>
    %c0_6 = arith.constant 0 : index
    %8 = arith.index_cast %c0_i32_2 : i32 to index
    %c0_7 = arith.constant 0 : index
    %c0_8 = arith.constant 0 : index
    %9 = vector.load %arg4[%c0_6, %8, %c0_7, %c0_8] : memref<1x4x2x128xf32, #tpu.memory_space<vmem>>, vector<1x1x2x128xf32>
    %10 = vector.shape_cast %9 : vector<1x1x2x128xf32> to vector<2x128xf32>
    %11 = vector.shape_cast %7 : vector<2x128xf32> to vector<1x1x2x128xf32>
    tpu.vector_store %arg4[%c0_6, %8, %c0_7, %c0_8], %11 {strides = array<i32>} : memref<1x4x2x128xf32, #tpu.memory_space<vmem>>, vector<1x1x2x128xf32>,
    %c1_i32 = arith.constant 1 : i32
    %c0_9 = arith.constant 0 : index
    %12 = arith.index_cast %c1_i32 : i32 to index
    %c0_10 = arith.constant 0 : index
    %c0_11 = arith.constant 0 : index
    %13 = vector.load %arg3[%c0_9, %12, %c0_10, %c0_11] : memref<1x4x2x128xf32, #tpu.memory_space<vmem>>, vector<1x1x2x128xf32>
    %14 = vector.shape_cast %13 : vector<1x1x2x128xf32> to vector<2x128xf32>
    %15 = arith.addf %7, %14 : vector<2x128xf32>
    %c0_12 = arith.constant 0 : index
    %16 = arith.index_cast %c1_i32 : i32 to index
    %c0_13 = arith.constant 0 : index
    %c0_14 = arith.constant 0 : index
    %17 = vector.load %arg4[%c0_12, %16, %c0_13, %c0_14] : memref<1x4x2x128xf32, #tpu.memory_space<vmem>>, vector<1x1x2x128xf32>
    %18 = vector.shape_cast %17 : vector<1x1x2x128xf32> to vector<2x128xf32>
    %19 = vector.shape_cast %15 : vector<2x128xf32> to vector<1x1x2x128xf32>
    tpu.vector_store %arg4[%c0_12, %16, %c0_13, %c0_14], %19 {strides = array<i32>} : memref<1x4x2x128xf32, #tpu.memory_space<vmem>>, vector<1x1x2x128xf32>,
    %c2_i32 = arith.constant 2 : i32
    %c0_15 = arith.constant 0 : index
    %20 = arith.index_cast %c2_i32 : i32 to index
    %c0_16 = arith.constant 0 : index
    %c0_17 = arith.constant 0 : index
    %21 = vector.load %arg3[%c0_15, %20, %c0_16, %c0_17] : memref<1x4x2x128xf32, #tpu.memory_space<vmem>>, vector<1x1x2x128xf32>
    %22 = vector.shape_cast %21 : vector<1x1x2x128xf32> to vector<2x128xf32>
    %23 = arith.addf %15, %22 : vector<2x128xf32>
    %c0_18 = arith.constant 0 : index
    %24 = arith.index_cast %c2_i32 : i32 to index
    %c0_19 = arith.constant 0 : index
    %c0_20 = arith.constant 0 : index
    %25 = vector.load %arg4[%c0_18, %24, %c0_19, %c0_20] : memref<1x4x2x128xf32, #tpu.memory_space<vmem>>, vector<1x1x2x128xf32>
    %26 = vector.shape_cast %25 : vector<1x1x2x128xf32> to vector<2x128xf32>
    %27 = vector.shape_cast %23 : vector<2x128xf32> to vector<1x1x2x128xf32>
    tpu.vector_store %arg4[%c0_18, %24, %c0_19, %c0_20], %27 {strides = array<i32>} : memref<1x4x2x128xf32, #tpu.memory_space<vmem>>, vector<1x1x2x128xf32>,
    %c3_i32 = arith.constant 3 : i32
    %c0_21 = arith.constant 0 : index
    %28 = arith.index_cast %c3_i32 : i32 to index
    %c0_22 = arith.constant 0 : index
    %c0_23 = arith.constant 0 : index
    %29 = vector.load %arg3[%c0_21, %28, %c0_22, %c0_23] : memref<1x4x2x128xf32, #tpu.memory_space<vmem>>, vector<1x1x2x128xf32>
    %30 = vector.shape_cast %29 : vector<1x1x2x128xf32> to vector<2x128xf32>
    %31 = arith.addf %23, %30 : vector<2x128xf32>
    %c0_24 = arith.constant 0 : index
    %32 = arith.index_cast %c3_i32 : i32 to index
    %c0_25 = arith.constant 0 : index
    %c0_26 = arith.constant 0 : index
    %33 = vector.load %arg4[%c0_24, %32, %c0_25, %c0_26] : memref<1x4x2x128xf32, #tpu.memory_space<vmem>>, vector<1x1x2x128xf32>
    %34 = vector.shape_cast %33 : vector<1x1x2x128xf32> to vector<2x128xf32>
    %35 = vector.shape_cast %31 : vector<2x128xf32> to vector<1x1x2x128xf32>
    tpu.vector_store %arg4[%c0_24, %32, %c0_25, %c0_26], %35 {strides = array<i32>} : memref<1x4x2x128xf32, #tpu.memory_space<vmem>>, vector<1x1x2x128xf32>,
    %c4_i32 = arith.constant 4 : i32
    %c0_27 = arith.constant 0 : index
    %c0_28 = arith.constant 0 : index
    %36 = vector.load %arg5[%c0_27, %c0_28] : memref<2x128xf32, #tpu.memory_space<vmem>>, vector<2x128xf32>
    tpu.vector_store %arg5[%c0_27, %c0_28], %31 {strides = array<i32>} : memref<2x128xf32, #tpu.memory_space<vmem>>, vector<2x128xf32>,
    return
  }
  func.func @transform_0(%arg0: i32, %arg1: i32, %arg2: i32) -> (i32, i32, i32, i32) {
    %c0_i32 = arith.constant 0 : i32
    %c0_i32_0 = arith.constant 0 : i32
    return %arg0, %arg2, %arg1, %c0_i32 : i32, i32, i32, i32
  }
  func.func @transform_1(%arg0: i32, %arg1: i32, %arg2: i32) -> (i32, i32, i32, i32) {
    %c0_i32 = arith.constant 0 : i32
    %c0_i32_0 = arith.constant 0 : i32
    return %arg0, %arg2, %arg1, %c0_i32 : i32, i32, i32, i32
  }
}

</mosaic_0001>

<llo_original>
// kernel: tpu_custom_call.1
$region0: #{tpu_custom_call.1}
  #allocation0 [shape = 'u32[]', space=smem, size = 0x4, offset = 0x4, fixed_abs, tag = 'smem constant byte address 0x4 - core index']
  #allocation1 [shape = 'u32[72,128]{1,0:T(1,128)}', space=vmem, size = 0x9000, scoped, tag = 'internal scratch']
  #allocation2 [shape = 'f32[2,128]{1,0:T(2,128)}', space=vmem, size = 0x400, scoped, tag = 'scratch operand']
  %s0 = inlined_call_operand.hbm [shape: f32[2,4,2,128], index: 0, kind: input, shape index: {}]
  %s1 = inlined_call_operand.hbm [shape: f32[2,4,2,128], index: 1, kind: output, shape index: {}]
  %s2 = sld [smem:[#allocation0]]
  $region45: #{tpu_custom_call.1} parent=0
    _
  %s4 = ssub.s32 1, %s2
  %s5 = scalar_select 0, %s4, %s2
  $region1: #{tpu_custom_call.1} parent=0
    #allocation3 [shape = 'u8[8192]{0}', space=vmem, size = 0x2000, scoped, tag = 'input window, operand 0']
    #allocation4 [shape = 's32[2]{0}', space=sflag, size = 0x8, scoped, tag = 'scoped memory for tpu_custom_call.1']
    #allocation5 [shape = 's32[2]{0}', space=sflag, size = 0x8, scoped, tag = 'scoped memory for tpu_custom_call.1']
    #allocation6 [shape = 'u8[8192]{0}', space=vmem, size = 0x2000, scoped, tag = 'output window, operand 0']
    %6 = vsyncpa [#allocation4], 0
    %s7 = scalar_lea.sflag [#allocation4], 1
    %8 = vsyncpa %s7, 0
    %9 = vsyncpa [#allocation5], 0
    %s10 = scalar_lea.sflag [#allocation5], 1
    %11 = vsyncpa %s10, 0
    loop: start=0, step=1, limit=4
    $region2: #{tpu_custom_call.1} parent=1 // loop_pre_header
      _
    $region3: #{tpu_custom_call.1} parent=1 // loop_header
      %s13 = sphi 0, %s17
      %p14 = scmp.ge.s32.totalorder %s13, 4
      %s20 = sphi 0, %s39
      %s21 = sphi 0, %s35
      %s22 = sphi 0, %s31
      %s23 = sphi 0, %s20
      %s24 = sphi 0, %s21
      %s25 = sphi 0, %s22
      %s26 = sphi 0, %s23
      %s27 = sphi 0, %s24
      %s28 = sphi 0, %s25
      %s46 = sphi 0, %s48
      %s49 = sphi 0, %s46
      %s50 = sphi 0, %s49
      %s66 = sphi 0, %s50
      %s76 = sphi 0, %s78
      %s79 = sphi 0, %s76
      %s80 = sphi 0, %s79
      %s96 = sphi 0, %s80
    $region4: #{tpu_custom_call.1} parent=1 // loop_header_branch
      %16 = sbr.rel (%p14) target = $region8
    $region5: #{tpu_custom_call.1} parent=1 // loop_body
      %s18 = ssub.s32 %s13, 1
      %s19 = ssub.s32 %s13, 2
      %s29 = sadd.s32 1, %s22
      %p30 = scmp.ge.s32.totalorder %s29, 1
      %s31 = scalar_select %p30, 0, %s29
      %s32 = sadd.s32 1, %s21
      %s33 = scalar_select %p30, %s32, %s21
      %p34 = scmp.ge.s32.totalorder %s33, 1
      %s35 = scalar_select %p34, 0, %s33
      %s36 = sadd.s32 1, %s20
      %s37 = scalar_select %p34, %s36, %s20
      %p38 = scmp.ge.s32.totalorder %s37, 2
      %s39 = scalar_select %p38, 0, %s37
      %s40 = ssub.s32 %s20, %s39
      %s41 = ssub.s32 %s22, %s31
      %s42 = sor.u32 %s40, %s41
      %s43 = ssub.s32 %s21, %s35
      %s44 = sor.u32 %s42, %s43
      %p45 = scmp.eq.s32.totalorder %s44, 0
      %s47 = sadd.s32 %s46, 1
      %s48 = scalar_select %p45, %s46, %s47
      %p51 = pneg %p45
      %p52 = scmp.eq.s32.totalorder %s13, 1
      %p53 = por %p51, %p52
      %p54 = scmp.ne.s32.totalorder %s46, %s49
      %p55 = scmp.eq.s32.totalorder %s13, 0
      %p56 = por %p54, %p55
      %p57 = scmp.ne.s32.totalorder %s46, %s49
      %p58 = scmp.eq.s32.totalorder %s18, 1
      %p59 = por %p57, %p58
      %p60 = scmp.ne.s32.totalorder %s49, %s50
      %p61 = scmp.eq.s32.totalorder %s18, 0
      %p62 = por %p60, %p61
      %p63 = scmp.ne.s32.totalorder %s49, %s50
      %p64 = scmp.eq.s32.totalorder %s19, 1
      %p65 = por %p63, %p64
      %p67 = scmp.ne.s32.totalorder %s50, %s66
      %p68 = scmp.eq.s32.totalorder %s19, 0
      %p69 = por %p67, %p68
      %s70 = ssub.s32 %s20, %s39
      %s71 = ssub.s32 %s22, %s31
      %s72 = sor.u32 %s70, %s71
      %s73 = ssub.s32 %s21, %s35
      %s74 = sor.u32 %s72, %s73
      %p75 = scmp.eq.s32.totalorder %s74, 0
      %s77 = sadd.s32 %s76, 1
      %s78 = scalar_select %p75, %s76, %s77
      %p81 = pneg %p75
      %p82 = scmp.eq.s32.totalorder %s13, 1
      %p83 = por %p81, %p82
      %p84 = scmp.ne.s32.totalorder %s76, %s79
      %p85 = scmp.eq.s32.totalorder %s13, 0
      %p86 = por %p84, %p85
      %p87 = scmp.ne.s32.totalorder %s76, %s79
      %p88 = scmp.eq.s32.totalorder %s18, 1
      %p89 = por %p87, %p88
      %p90 = scmp.ne.s32.totalorder %s79, %s80
      %p91 = scmp.eq.s32.totalorder %s18, 0
      %p92 = por %p90, %p91
      %p93 = scmp.ne.s32.totalorder %s79, %s80
      %p94 = scmp.eq.s32.totalorder %s19, 1
      %p95 = por %p93, %p94
      %p97 = scmp.ne.s32.totalorder %s80, %s96
      %p98 = scmp.eq.s32.totalorder %s19, 0
      %p99 = por %p97, %p98
      %p100 = scmp.le.s32.totalorder 1, %s13
      %p101 = scmp.lt.s32.totalorder %s13, 3
      %p102 = pnand %p100, %p101
      %p103 = pneg %p102
      // Predicated region
      $region9: #{tpu_custom_call.1} parent=5 // pred_check
        _
      $region10: #{tpu_custom_call.1} parent=5 // pred_check_branch
        %105 = sbr.rel (%p102) target = $region12
      $region11: #{tpu_custom_call.1} parent=5 // pred_region
        %s106 = ssub.s32 %s13, 1
      $region12: #{tpu_custom_call.1} parent=5 // pred_fallthru
        _
      %p107 = scmp.lt.s32.totalorder %s13, 2
      // Predicated region
      $region13: #{tpu_custom_call.1} parent=5 // pred_check
        %p108 = pneg %p107
      $region14: #{tpu_custom_call.1} parent=5 // pred_check_branch
        %110 = sbr.rel (%p108) target = $region16
      $region15: #{tpu_custom_call.1} parent=5 // pred_region
        // Predicated region
        $region17: #{tpu_custom_call.1} parent=15 // pred_check
          %p111 = pneg %p56
        $region18: #{tpu_custom_call.1} parent=15 // pred_check_branch
          %113 = sbr.rel (%p111) target = $region20
        $region19: #{tpu_custom_call.1} parent=15 // pred_region
          %s114 = sand.u32 %s46, 1
          %s115 = scalar_lea.sflag [#allocation4], %s114
          %s116 = sand.u32 %s46, 1
          %s117 = smul.addr %s116, 8
          %s118 = scalar_lea.vmem [#allocation3], %s117
          %s119 = smul.u32 4, %s22
          %121 = vsyncadd %s115, 0
          %s122 = sadd.s32 %s21, %s119
          %s123 = smul.addr %s20, 4
          %s124 = sadd.s32 %s122, %s123
          %s125 = smul.addr %s124, 2
          %s126 = scalar_lea.hbm %s0, %s125
          %s127 = sshll.u32 %s126, 4
          %s128 = int_to_ptr.hbm [resolvable:$true] %s127
          %s129 = sshll.u32 %s118, 4
          %s130 = int_to_ptr.vmem [resolvable:$true] %s129
          %135 = dma.hbm_to_vmem [thread:$0]  %s128, 128, %s130, %s115, 32, 32, 2
        $region20: #{tpu_custom_call.1} parent=15 // pred_fallthru
          _
      $region16: #{tpu_custom_call.1} parent=5 // pred_fallthru
        _
      %p136 = scmp.le.s32.totalorder 1, %s13
      %p137 = scmp.lt.s32.totalorder %s13, 3
      %p138 = pnand %p136, %p137
      %p139 = pneg %p138
      // Predicated region
      $region21: #{tpu_custom_call.1} parent=5 // pred_check
        _
      $region22: #{tpu_custom_call.1} parent=5 // pred_check_branch
        %141 = sbr.rel (%p138) target = $region24
      $region23: #{tpu_custom_call.1} parent=5 // pred_region
        %s142 = ssub.s32 %s13, 1
        %s143 = sand.u32 %s49, 1
        %s144 = scalar_lea.sflag [#allocation4], %s143
        %s145 = sand.u32 %s49, 1
        %s146 = smul.addr %s145, 8
        %s147 = scalar_lea.vmem [#allocation3], %s146
        // Predicated region
        $region25: #{tpu_custom_call.1} parent=23 // pred_check
          %p148 = pneg %p62
        $region26: #{tpu_custom_call.1} parent=23 // pred_check_branch
          %150 = sbr.rel (%p148) target = $region28
        $region27: #{tpu_custom_call.1} parent=23 // pred_region
          %152 = dma.done %s144, 128
        $region28: #{tpu_custom_call.1} parent=23 // pred_fallthru
          _
        %s153 = sand.u32 %s49, 1
        %s154 = scalar_lea.sflag [#allocation4], %s153
        %s155 = sand.u32 %s49, 1
        %s156 = smul.addr %s155, 8
        %s157 = scalar_lea.vmem [#allocation3], %s156
        %p158 = pneg %p62
        %p159 = pneg %p59
        %p160 = pneg %p92
        %p161 = pneg %p89
        %s162 = sand.u32 %s79, 1
        %s163 = scalar_lea.sflag [#allocation5], %s162
        %s164 = sand.u32 %s79, 1
        %s165 = smul.addr %s164, 8
        %s166 = scalar_lea.vmem [#allocation6], %s165
        %s167 = smul.u32 4, %s25
        %s168 = smul.u32 4, %s25
        %p169 = scmp.eq.s32.totalorder %s25, 0
        // Predicated region
        $region29: #{tpu_custom_call.1} parent=23 // pred_check
          %p170 = pneg %p169
        $region30: #{tpu_custom_call.1} parent=23 // pred_check_branch
          %172 = sbr.rel (%p170) target = $region32
        $region31: #{tpu_custom_call.1} parent=23 // pred_region
          %173 = vst [vmem:[#allocation2] sm:$0x3] 0.0
        $region32: #{tpu_custom_call.1} parent=23 // pred_fallthru
          _
        %v174 = vld [vmem:[#allocation2] sm:$0x3]
        %v175 = vld [vmem:[%s147] sm:$0x3]
        %v176 = vadd.f32 %v174, %v175
        %177 = vst [vmem:[%s166] sm:$0x3] %v176
        %s178 = scalar_lea.vmem %s147, 2 [#allocation3]
        %v179 = vld [vmem:[%s178] sm:$0x3]
        %v180 = vadd.f32 %v176, %v179
        %s181 = scalar_lea.vmem %s166, 2 [#allocation6]
        %182 = vst [vmem:[%s181] sm:$0x3] %v180
        %s183 = scalar_lea.vmem %s147, 4 [#allocation3]
        %v184 = vld [vmem:[%s183] sm:$0x3]
        %v185 = vadd.f32 %v180, %v184
        %s186 = scalar_lea.vmem %s166, 4 [#allocation6]
        %187 = vst [vmem:[%s186] sm:$0x3] %v185
        %s188 = scalar_lea.vmem %s147, 6 [#allocation3]
        %v189 = vld [vmem:[%s188] sm:$0x3]
        %v190 = vadd.f32 %v185, %v189
        %s191 = scalar_lea.vmem %s166, 6 [#allocation6]
        %192 = vst [vmem:[%s191] sm:$0x3] %v190
        %193 = vst [vmem:[#allocation2] sm:$0x3] %v190
        %s194 = sand.u32 %s79, 1
        %s195 = scalar_lea.sflag [#allocation5], %s194
        %s196 = sand.u32 %s79, 1
        %s197 = smul.addr %s196, 8
        %s198 = scalar_lea.vmem [#allocation6], %s197
        // Predicated region
        $region33: #{tpu_custom_call.1} parent=23 // pred_check
          %p199 = pneg %p89
        $region34: #{tpu_custom_call.1} parent=23 // pred_check_branch
          %201 = sbr.rel (%p199) target = $region36
        $region35: #{tpu_custom_call.1} parent=23 // pred_region
          %s202 = smul.u32 4, %s25
          %204 = vsyncadd %s195, 0
          %s205 = sadd.s32 %s24, %s202
          %s206 = smul.addr %s23, 4
          %s207 = sadd.s32 %s205, %s206
          %s208 = smul.addr %s207, 2
          %s209 = scalar_lea.hbm %s1, %s208
          %s210 = sshll.u32 %s198, 4
          %s211 = int_to_ptr.vmem [resolvable:$true] %s210
          %s212 = sshll.u32 %s209, 4
          %s213 = int_to_ptr.hbm [resolvable:$true] %s212
          %218 = dma.vmem_to_hbm [thread:$0]  %s211, 128, %s213, %s195, 32, 32, 2
        $region36: #{tpu_custom_call.1} parent=23 // pred_fallthru
          _
      $region24: #{tpu_custom_call.1} parent=5 // pred_fallthru
        _
      %p219 = scmp.le.s32.totalorder 2, %s13
      // Predicated region
      $region37: #{tpu_custom_call.1} parent=5 // pred_check
        %p220 = pneg %p219
      $region38: #{tpu_custom_call.1} parent=5 // pred_check_branch
        %222 = sbr.rel (%p220) target = $region40
      $region39: #{tpu_custom_call.1} parent=5 // pred_region
        %s223 = ssub.s32 %s13, 2
        // Predicated region
        $region41: #{tpu_custom_call.1} parent=39 // pred_check
          %p224 = pneg %p95
        $region42: #{tpu_custom_call.1} parent=39 // pred_check_branch
          %226 = sbr.rel (%p224) target = $region44
        $region43: #{tpu_custom_call.1} parent=39 // pred_region
          %s227 = sand.u32 %s80, 1
          %s228 = scalar_lea.sflag [#allocation5], %s227
          %s229 = sand.u32 %s80, 1
          %s230 = smul.addr %s229, 8
          %s231 = scalar_lea.vmem [#allocation6], %s230
          %233 = dma.done %s228, 128
        $region44: #{tpu_custom_call.1} parent=39 // pred_fallthru
          _
      $region40: #{tpu_custom_call.1} parent=5 // pred_fallthru
        _
    $region6: #{tpu_custom_call.1} parent=1 // loop_footer
      %s17 = sadd.s32 1, %s13
    $region7: #{tpu_custom_call.1} parent=1 // loop_footer_branch
      %12 = sbr.rel target = $region3
    $region8: #{tpu_custom_call.1} parent=1 // loop_exit
      _
    %234 = vsyncpa [#allocation4], 1
    %s235 = scalar_lea.sflag [#allocation4], 1
    %236 = vsyncpa %s235, 1
    %237 = vsyncpa [#allocation5], 1
    %s238 = scalar_lea.sflag [#allocation5], 1
    %239 = vsyncpa %s238, 1

</llo_original>
